<compile_context>
chip_gen: v6e
topology: v6e:2x2x1
jax: 0.10.0
libtpu: 0.0.40
codegen_flags: <defaults>
</compile_context>

<pallas_src>
import functools

import jax
import jax.numpy as jnp
from jax import lax
from jax.experimental import pallas as pl
from jax.experimental.pallas import tpu as pltpu


def _round_up(x, m):
    return (x + m - 1) // m * m


def _choose_layout(n):
    """Pick lane-dense slab width. Returns (cols, n_alloc) with n_alloc % (8*cols)==0."""
    if n % 1024 == 0:
        for c in (512, 256, 128):
            if n % (8 * c) == 0:
                return c, n          # no padding needed at all
    # Ragged fallback: tiny pad (< 1024 elements).
    return 128, _round_up(n, 1024)


def _choose_tiling(rows, cols, itemsize, block_bytes, chunk_bytes):
    """rows is a multiple of 8. Returns (tm, chunk, num_tiles); chunk | tm, tm <= rows."""
    # Inner row-chunk: keeps per-chunk f32 intermediates ~chunk_bytes each.
    chunk = max(8, min(rows, (chunk_bytes // (cols * 4)) // 8 * 8))
    # Per-input block row cap (~block_bytes per block per buffer), multiple of chunk.
    tm_cap = max(chunk, (block_bytes // (cols * itemsize)) // chunk * chunk)
    if rows <= tm_cap:
        if rows >= 2 * chunk:
            tm = _round_up(rows // 2, chunk)     # 2 tiles -> both v7x TCs busy
        else:
            tm = rows                            # tiny problem: single tile
    else:
        nt = _round_up(pl.cdiv(rows, tm_cap), 2)  # even tile count for 2 TCs
        tm = _round_up(pl.cdiv(rows, nt), chunk)
    chunk = min(chunk, tm)
    while tm % chunk:                            # keep chunk | tm (chunk stays >= 8)
        chunk -= 8
    return tm, chunk, pl.cdiv(rows, tm)


def _qfocal_kernel(pred_ref, true_ref, out_ref, *, gamma, alpha, rows_valid,
                   tm, cols, chunk, mask_tail):
    c1 = 1.0 - alpha          # alpha_factor = c1 + t * c2  (strength-reduced)
    c2 = 2.0 * alpha - 1.0
    if mask_tail:
        row_base = pl.program_id(0) * tm

    def chunk_loss(j, acc):
        r0 = j * chunk
        if not isinstance(r0, int):
            r0 = pl.multiple_of(r0, chunk)
        x = pred_ref[pl.ds(r0, chunk), :].astype(jnp.float32)
        t = true_ref[pl.ds(r0, chunk), :].astype(jnp.float32)

        # One EUP exp, reused for both the BCE log1p term and the sigmoid.
        e = jnp.exp(-jnp.abs(x))
        # Numerically stable BCE-with-logits (== torch.nn.BCEWithLogitsLoss):
        #   max(x, 0) - x*t + log(1 + exp(-|x|))
        bce = jnp.maximum(x, 0.0) - x * t + jnp.log1p(e)
        # sigmoid(x): x>=0 -> 1/(1+e); x<0 -> e/(1+e).  Exact divide kept on
        # purpose (keeps sigmoid(0)==0.5 exact for the zero-loss padding).
        r = 1.0 / (1.0 + e)
        p = jnp.where(x >= 0.0, r, e * r)

        af = c1 + t * c2
        d = jnp.abs(t - p)
        if gamma == 1.5:       # default: no pow -> no exp/log pair, no log(0)
            mod = d * jnp.sqrt(d)
        elif gamma == 2.0:
            mod = d * d
        elif gamma == 1.0:
            mod = d
        elif gamma == 3.0:
            mod = d * d * d
        else:
            # TODO(synk): generic gamma uses pow (exp/log); forward value is
            # fine but a future VJP would NaN at d == 0.
            mod = jnp.power(d, gamma)
        loss = bce * af * mod

        if mask_tail:
            rid = row_base + r0 + lax.broadcasted_iota(jnp.int32, (chunk, cols), 0)
            loss = jnp.where(rid < rows_valid, loss, 0.0)

        # (chunk, cols) -> (chunk//8, 8, cols) is a free sublane regroup;
        # summing axis 0 is pure VPU vreg adds -> lane-dense (8, cols) partial.
        return acc + loss.reshape(chunk // 8, 8, cols).sum(axis=0)

    acc0 = jnp.zeros((8, cols), jnp.float32)
    n_chunks = tm // chunk
    if n_chunks == 1:
        acc = chunk_loss(0, acc0)
    else:
        acc = lax.fori_loop(0, n_chunks, chunk_loss, acc0)
    out_ref[0] = acc


def qfocal_loss(pred, true, gamma=1.5, alpha=0.25, reduction="mean",
                block_bytes=4 << 20, chunk_bytes=128 << 10):
    """Quality focal loss over BCEWithLogits. pred/true: same shape (e.g. NCHW).

    pred/true may be bf16 (recommended: halves HBM traffic; the kernel upcasts
    to f32 per chunk) or f32.  Returns the scalar mean (or sum) loss.
    """
    assert pred.shape == true.shape, (pred.shape, true.shape)
    n = pred.size
    assert n > 0
    itemsize = jnp.dtype(pred.dtype).itemsize

    cols, n_alloc = _choose_layout(n)
    pred_flat = pred.reshape(-1)
    true_flat = true.reshape(-1)
    padded = n_alloc != n
    if padded:
        # Tiny (< 1024 elem) tail pad with (pred=0, true=0.5): sigmoid(0)==0.5
        # exactly, so padded elements contribute exactly 0 loss (no mask needed
        # for them; only out-of-array grid overreach is masked in-kernel).
        pred_flat = jnp.pad(pred_flat, (0, n_alloc - n), constant_values=0.0)
        true_flat = jnp.pad(true_flat, (0, n_alloc - n), constant_values=0.5)
    rows = n_alloc // cols
    pred2d = pred_flat.reshape(rows, cols)
    true2d = true_flat.reshape(rows, cols)

    tm, chunk, num_tiles = _choose_tiling(rows, cols, itemsize, block_bytes, chunk_bytes)
    mask_tail = (rows % tm) != 0   # last grid tile reads past the array -> mask it

    kernel = functools.partial(
        _qfocal_kernel, gamma=float(gamma), alpha=float(alpha), rows_valid=rows,
        tm=tm, cols=cols, chunk=chunk, mask_tail=mask_tail)

    partials = pl.pallas_call(
        kernel,
        out_shape=jax.ShapeDtypeStruct((num_tiles, 8, cols), jnp.float32),
        grid_spec=pltpu.PrefetchScalarGridSpec(
            num_scalar_prefetch=0,
            grid=(num_tiles,),
            in_specs=[
                pl.BlockSpec((tm, cols), lambda i: (i, 0)),
                pl.BlockSpec((tm, cols), lambda i: (i, 0)),
            ],
            out_specs=pl.BlockSpec((1, 8, cols), lambda i: (i, 0, 0)),
        ),
        compiler_params=pltpu.CompilerParams(
            # Independent per-tile partials -> shardable across v7x's 2 TCs.
            dimension_semantics=("parallel",),
            # 2 inputs x 2 pipeline buffers x ~4 MiB blocks + chunk scratch.
            vmem_limit_bytes=40 * 1024 * 1024,
            # Let XLA fuse the flatten/reshape producers into the operands
            # instead of materializing relayouted copies in HBM.
            allow_input_fusion=None if padded else [True, True],
        ),
    )(pred2d, true2d)

    total = jnp.sum(partials, dtype=jnp.float32)
    if reduction == "mean":
        return total / jnp.float32(n)
    if reduction == "sum":
        return total
    # TODO(synk): reduction='none' (per-element loss map) would need a
    # map-style kernel; BCEWithLogitsLoss defaults to 'mean' so only mean/sum
    # are implemented here.
    raise NotImplementedError("reduction='none' not implemented in-kernel")


def _reference(pred, true, gamma=1.5, alpha=0.25):
    x = pred.astype(jnp.float32)
    t = true.astype(jnp.float32)
    bce = jnp.maximum(x, 0.0) - x * t + jnp.log1p(jnp.exp(-jnp.abs(x)))
    p = jax.nn.sigmoid(x)
    af = t * alpha + (1.0 - t) * (1.0 - alpha)
    mf = jnp.abs(t - p) ** gamma
    return jnp.mean(bce * af * mf)


if __name__ == "__main__":
    key = jax.random.PRNGKey(0)
    k1, k2, k3, k4, k5, k6 = jax.random.split(key, 6)

    # 1) NCHW f32, hard 0/1 targets: no pad, single lane-dense tile, no mask.
    pred = jax.random.normal(k1, (2, 4, 16, 16), dtype=jnp.float32)
    true = (jax.random.uniform(k2, (2, 4, 16, 16)) > 0.7).astype(jnp.float32)
    out = jax.block_until_ready(qfocal_loss(pred, true, gamma=1.5, alpha=0.25))
    ref = _reference(pred, true)
    assert jnp.allclose(out, ref, rtol=1e-5, atol=1e-6), (out, ref)

    # 2) Soft targets with tiny forced blocks: multi-tile "parallel" grid,
    #    multi-chunk inner fori_loop and ragged-tail in-kernel masking.
    pred2 = jax.random.normal(k3, (4, 9, 16, 16), dtype=jnp.float32)
    true2 = jax.random.uniform(k4, (4, 9, 16, 16), dtype=jnp.float32)
    out2 = jax.block_until_ready(
        qfocal_loss(pred2, true2, block_bytes=16 * 128 * 4, chunk_bytes=8 * 128 * 4))
    ref2 = _reference(pred2, true2)
    assert jnp.allclose(out2, ref2, rtol=1e-5, atol=1e-6), (out2, ref2)

    # 3) Element count not a multiple of 1024: exercises the tiny-pad fallback
    #    (exact-zero contribution) and the gamma=2.0 branch.
    pred3 = jax.random.normal(k5, (3, 5, 16, 16), dtype=jnp.float32)
    true3 = (jax.random.uniform(k6, (3, 5, 16, 16)) > 0.5).astype(jnp.float32)
    out3 = jax.block_until_ready(qfocal_loss(pred3, true3, gamma=2.0))
    ref3 = _reference(pred3, true3, gamma=2.0)
    assert jnp.allclose(out3, ref3, rtol=1e-5, atol=1e-6), (out3, ref3)

    # 4) bf16 inputs (half the HBM traffic); kernel upcasts to f32 internally.
    out4 = jax.block_until_ready(
        qfocal_loss(pred.astype(jnp.bfloat16), true.astype(jnp.bfloat16)))
    ref4 = _reference(pred.astype(jnp.bfloat16), true.astype(jnp.bfloat16))
    assert jnp.allclose(out4, ref4, rtol=5e-3, atol=1e-5), (out4, ref4)

    print("KERNEL_OK")
</pallas_src>

<mosaic_0001>
module attributes {stable_mosaic.version = 11 : i64} {
  func.func @_qfocal_kernel(%arg0: i32, %arg1: memref<8x256xf32, #tpu.memory_space<vmem>>, %arg2: memref<8x256xf32, #tpu.memory_space<vmem>>, %arg3: memref<1x8x256xf32, #tpu.memory_space<vmem>>) attributes {dimension_semantics = [#tpu.dimension_semantics<parallel>], iteration_bounds = array<i64: 1>, scalar_prefetch = 0 : i64, scratch_operands = 0 : i64, tpu.core_type = #tpu.core_type<tc>, window_params = [{transform_indices = @transform_0, window_bounds = array<i64: 8, 256>}, {transform_indices = @transform_1, window_bounds = array<i64: 8, 256>}, {transform_indices = @transform_2, window_bounds = array<i64: 1, 8, 256>}]} {
    %cst = arith.constant 0.000000e+00 : f32
    %0 = vector.broadcast %cst : f32 to vector<8x256xf32>
    %c0 = arith.constant 0 : index
    %c0_0 = arith.constant 0 : index
    %1 = vector.load %arg1[%c0, %c0_0] : memref<8x256xf32, #tpu.memory_space<vmem>>, vector<8x256xf32>
    %c0_1 = arith.constant 0 : index
    %c0_2 = arith.constant 0 : index
    %2 = vector.load %arg2[%c0_1, %c0_2] : memref<8x256xf32, #tpu.memory_space<vmem>>, vector<8x256xf32>
    %3 = math.absf %1 : vector<8x256xf32>
    %cst_3 = arith.constant 0.000000e+00 : f32
    %4 = vector.broadcast %cst_3 : f32 to vector<8x256xf32>
    %5 = arith.subf %4, %3 : vector<8x256xf32>
    %6 = math.exp %5 : vector<8x256xf32>
    %cst_4 = arith.constant 0.000000e+00 : f32
    %7 = vector.broadcast %cst_4 : f32 to vector<8x256xf32>
    %8 = arith.maximumf %1, %7 : vector<8x256xf32>
    %9 = arith.mulf %1, %2 : vector<8x256xf32>
    %10 = arith.subf %8, %9 : vector<8x256xf32>
    %11 = math.log1p %6 : vector<8x256xf32>
    %12 = arith.addf %10, %11 : vector<8x256xf32>
    %cst_5 = arith.constant 1.000000e+00 : f32
    %13 = vector.broadcast %cst_5 : f32 to vector<8x256xf32>
    %14 = arith.addf %13, %6 : vector<8x256xf32>
    %cst_6 = arith.constant 1.000000e+00 : f32
    %15 = vector.broadcast %cst_6 : f32 to vector<8x256xf32>
    %16 = arith.divf %15, %14 : vector<8x256xf32>
    %cst_7 = arith.constant 0.000000e+00 : f32
    %17 = vector.broadcast %cst_7 : f32 to vector<8x256xf32>
    %18 = arith.cmpf oge, %1, %17 : vector<8x256xf32>
    %19 = arith.mulf %6, %16 : vector<8x256xf32>
    %20 = arith.select %18, %16, %19 : vector<8x256xi1>, vector<8x256xf32>
    %cst_8 = arith.constant -5.000000e-01 : f32
    %21 = vector.broadcast %cst_8 : f32 to vector<8x256xf32>
    %22 = arith.mulf %2, %21 : vector<8x256xf32>
    %cst_9 = arith.constant 7.500000e-01 : f32
    %23 = vector.broadcast %cst_9 : f32 to vector<8x256xf32>
    %24 = arith.addf %23, %22 : vector<8x256xf32>
    %25 = arith.subf %2, %20 : vector<8x256xf32>
    %26 = math.absf %25 : vector<8x256xf32>
    %27 = math.sqrt %26 : vector<8x256xf32>
    %28 = arith.mulf %26, %27 : vector<8x256xf32>
    %29 = arith.mulf %12, %24 : vector<8x256xf32>
    %30 = arith.mulf %29, %28 : vector<8x256xf32>
    %31 = vector.shape_cast %30 : vector<8x256xf32> to vector<1x8x256xf32>
    %cst_10 = arith.constant dense<0.000000e+00> : vector<8x256xf32>
    %32 = vector.multi_reduction <add>, %31, %cst_10 [0] : vector<1x8x256xf32> to vector<8x256xf32>
    %33 = arith.addf %0, %32 : vector<8x256xf32>
    %c0_11 = arith.constant 0 : index
    %c0_12 = arith.constant 0 : index
    %c0_13 = arith.constant 0 : index
    %34 = vector.load %arg3[%c0_11, %c0_12, %c0_13] : memref<1x8x256xf32, #tpu.memory_space<vmem>>, vector<1x8x256xf32>
    %35 = vector.shape_cast %34 : vector<1x8x256xf32> to vector<8x256xf32>
    %36 = vector.shape_cast %33 : vector<8x256xf32> to vector<1x8x256xf32>
    tpu.vector_store %arg3[%c0_11, %c0_12, %c0_13], %36 {strides = array<i32>} : memref<1x8x256xf32, #tpu.memory_space<vmem>>, vector<1x8x256xf32>,
    return
  }
  func.func @transform_0(%arg0: i32) -> (i32, i32) {
    %c0_i32 = arith.constant 0 : i32
    %c0_i32_0 = arith.constant 0 : i32
    return %arg0, %c0_i32 : i32, i32
  }
  func.func @transform_1(%arg0: i32) -> (i32, i32) {
    %c0_i32 = arith.constant 0 : i32
    %c0_i32_0 = arith.constant 0 : i32
    return %arg0, %c0_i32 : i32, i32
  }
  func.func @transform_2(%arg0: i32) -> (i32, i32, i32) {
    %c0_i32 = arith.constant 0 : i32
    %c0_i32_0 = arith.constant 0 : i32
    %c0_i32_1 = arith.constant 0 : i32
    return %arg0, %c0_i32, %c0_i32_0 : i32, i32, i32
  }
}

</mosaic_0001>

<llo_original>
// kernel: tpu_custom_call.1
$region0: #{tpu_custom_call.1}
  #allocation0 [shape = 'u32[]', space=smem, size = 0x4, offset = 0x4, fixed_abs, tag = 'smem constant byte address 0x4 - core index']
  #allocation1 [shape = 'u32[144,128]{1,0:T(1,128)}', space=vmem, size = 0x12000, scoped, tag = 'internal scratch']
  %s0 = inlined_call_operand.hbm [shape: f32[8,256], index: 0, kind: input, shape index: {}]
  %s1 = inlined_call_operand.hbm [shape: f32[8,256], index: 1, kind: input, shape index: {}]
  %s2 = inlined_call_operand.hbm [shape: f32[1,8,256], index: 2, kind: output, shape index: {}]
  %s3 = sld [smem:[#allocation0]]
  $region26: #{tpu_custom_call.1} parent=0
    _
  %s5 = ssub.s32 1, %s3
  %s6 = scalar_select 0, %s5, %s3
  $region1: #{tpu_custom_call.1} parent=0
    #allocation2 [shape = 'u8[8192]{0}', space=vmem, size = 0x2000, scoped, tag = 'input window, operand 0, single buffered']
    #allocation3 [shape = 's32[1]{0}', space=sflag, size = 0x4, scoped, tag = 'scoped memory for tpu_custom_call.1']
    #allocation4 [shape = 's32[1]{0}', space=sflag, size = 0x4, scoped, tag = 'scoped memory for tpu_custom_call.1']
    #allocation5 [shape = 'u8[8192]{0}', space=vmem, size = 0x2000, scoped, tag = 'input window, operand 1, single buffered']
    #allocation6 [shape = 's32[1]{0}', space=sflag, size = 0x4, scoped, tag = 'scoped memory for tpu_custom_call.1']
    #allocation7 [shape = 'u8[8192]{0}', space=vmem, size = 0x2000, scoped, tag = 'output window, operand 0, single buffered']
    %7 = vsyncpa [#allocation3], 0
    %8 = vsyncpa [#allocation6], 0
    %9 = vsyncpa [#allocation4], 0
    // Predicated region
    $region2: #{tpu_custom_call.1} parent=1 // pred_check
      _
    $region3: #{tpu_custom_call.1} parent=1 // pred_check_branch
      %11 = sbr.rel (0) target = $region5
    $region4: #{tpu_custom_call.1} parent=1 // pred_region
      %s13 = ssub.s32 256, 256
      %14 = vsyncadd [#allocation3], %s13
      %s16 = sshll.u32 [#allocation2], 4
      %s17 = int_to_ptr.vmem [resolvable:$true] %s16
      %19 = dma.hbm_to_vmem [thread:$0]  %s0, 256, %s17, [#allocation3]
    $region5: #{tpu_custom_call.1} parent=1 // pred_fallthru
      _
    // Predicated region
    $region6: #{tpu_custom_call.1} parent=1 // pred_check
      _
    $region7: #{tpu_custom_call.1} parent=1 // pred_check_branch
      %21 = sbr.rel (0) target = $region9
    $region8: #{tpu_custom_call.1} parent=1 // pred_region
      %s23 = ssub.s32 256, 256
      %24 = vsyncadd [#allocation6], %s23
      %s26 = sshll.u32 [#allocation5], 4
      %s27 = int_to_ptr.vmem [resolvable:$true] %s26
      %29 = dma.hbm_to_vmem [thread:$0]  %s1, 256, %s27, [#allocation6]
    $region9: #{tpu_custom_call.1} parent=1 // pred_fallthru
      _
    // Predicated region
    $region10: #{tpu_custom_call.1} parent=1 // pred_check
      _
    $region11: #{tpu_custom_call.1} parent=1 // pred_check_branch
      %31 = sbr.rel (0) target = $region13
    $region12: #{tpu_custom_call.1} parent=1 // pred_region
      %32 = dma.done [#allocation3], 256
    $region13: #{tpu_custom_call.1} parent=1 // pred_fallthru
      _
    // Predicated region
    $region14: #{tpu_custom_call.1} parent=1 // pred_check
      _
    $region15: #{tpu_custom_call.1} parent=1 // pred_check_branch
      %34 = sbr.rel (0) target = $region17
    $region16: #{tpu_custom_call.1} parent=1 // pred_region
      %35 = dma.done [#allocation6], 256
    $region17: #{tpu_custom_call.1} parent=1 // pred_fallthru
      _
    %v36 = vld [vmem:[#allocation2] sm:$0xff]
    %v37 = vld [vmem:[#allocation2 + $0x8] sm:$0xff]
    %v38 = vld [vmem:[#allocation5] sm:$0xff]
    %v39 = vld [vmem:[#allocation5 + $0x8] sm:$0xff]
    %v40 = vand.u32 2147483647, %v36
    %v41 = vand.u32 2147483647, %v37
    %v42 = vsub.f32 0.0, %v40
    %v43 = vsub.f32 0.0, %v41
    %v44 = vmul.f32 %v42, 1.442695
    %v45 = vpow.pop %v44
    %v46 = vmul.f32 %v43, 1.442695
    %v47 = vpow.pop %v46
    %v48 = vmax.f32 %v36, 0.0
    %v49 = vmax.f32 %v37, 0.0
    %v50 = vmul.f32 %v36, %v38
    %v51 = vmul.f32 %v37, %v39
    %v52 = vsub.f32 %v48, %v50
    %v53 = vsub.f32 %v49, %v51
    %v54 = vadd.f32 %v45, 1.0
    %v55 = vlog2.pop %v54
    %v56 = vmul.f32 %v55, 0.6931472
    %v57 = vmul.f32 -0.5, %v45
    %v58 = vadd.f32 %v57, 1.0
    %v59 = vmul.f32 %v58, %v45
    %v60 = vand.u32 2147483647, %v45
    %vm61 = vcmp.lt.f32.partialorder %v60, 0.0004427343
    %v62 = vsel %vm61, %v59, %v56
    %v63 = vadd.f32 %v47, 1.0
    %v64 = vlog2.pop %v63
    %v65 = vmul.f32 %v64, 0.6931472
    %v66 = vmul.f32 -0.5, %v47
    %v67 = vadd.f32 %v66, 1.0
    %v68 = vmul.f32 %v67, %v47
    %v69 = vand.u32 2147483647, %v47
    %vm70 = vcmp.lt.f32.partialorder %v69, 0.0004427343
    %v71 = vsel %vm70, %v68, %v65
    %v72 = vadd.f32 %v52, %v62
    %v73 = vadd.f32 %v53, %v71
    %v74 = vadd.f32 %v45, 1.0
    %v75 = vadd.f32 %v47, 1.0
    %v76 = vrcp.pop %v74
    %v77 = vmul.f32 1.0, %v76
    %v78 = vrcp.pop %v75
    %v79 = vmul.f32 1.0, %v78
    %vm80 = vcmp.ge.f32.partialorder %v36, 0.0
    %vm81 = vcmp.ge.f32.partialorder %v37, 0.0
    %v82 = vmul.f32 %v45, %v77
    %v83 = vmul.f32 %v47, %v79
    %v84 = vsel %vm80, %v77, %v82
    %v85 = vsel %vm81, %v79, %v83
    %v86 = vmul.f32 %v38, -0.5
    %v87 = vmul.f32 %v39, -0.5
    %v88 = vadd.f32 %v86, 0.75
    %v89 = vadd.f32 %v87, 0.75
    %v90 = vsub.f32 %v38, %v84
    %v91 = vsub.f32 %v39, %v85
    %v92 = vand.u32 2147483647, %v90
    %v93 = vand.u32 2147483647, %v91
    %v94 = vrsqrt.pop %v92
    %v95 = vmul.f32 %v92, %v94
    %vm96 = vcmp.eq.f32.partialorder %v92, inf
    %v97 = vsel %vm96, %v92, %v95
    %vm98 = vcmp.eq.f32.partialorder %v92, 0.0
    %v99 = vand.u32 %v92, 2147483648
    %v100 = vsel %vm98, %v99, %v97
    %v101 = vrsqrt.pop %v93
    %v102 = vmul.f32 %v93, %v101
    %vm103 = vcmp.eq.f32.partialorder %v93, inf
    %v104 = vsel %vm103, %v93, %v102
    %vm105 = vcmp.eq.f32.partialorder %v93, 0.0
    %v106 = vand.u32 %v93, 2147483648
    %v107 = vsel %vm105, %v106, %v104
    %v108 = vmul.f32 %v92, %v100
    %v109 = vmul.f32 %v93, %v107
    %v110 = vmul.f32 %v72, %v88
    %v111 = vmul.f32 %v73, %v89
    %v112 = vmul.f32 %v110, %v108
    %v113 = vmul.f32 %v111, %v109
    %v114 = vadd.f32 %v112, 0.0
    %v115 = vadd.f32 %v113, 0.0
    %v116 = vadd.f32 %v114, 0.0
    %v117 = vadd.f32 %v115, 0.0
    %118 = vst [vmem:[#allocation7] sm:$0xff] %v116
    %119 = vst [vmem:[#allocation7 + $0x8] sm:$0xff] %v117
    // Predicated region
    $region18: #{tpu_custom_call.1} parent=1 // pred_check
      _
    $region19: #{tpu_custom_call.1} parent=1 // pred_check_branch
      %121 = sbr.rel (0) target = $region21
    $region20: #{tpu_custom_call.1} parent=1 // pred_region
      %s123 = ssub.s32 256, 256
      %124 = vsyncadd [#allocation4], %s123
      %s126 = sshll.u32 [#allocation7], 4
      %s127 = int_to_ptr.vmem [resolvable:$true] %s126
      %129 = dma.vmem_to_hbm [thread:$0]  %s127, 256, %s2, [#allocation4]
    $region21: #{tpu_custom_call.1} parent=1 // pred_fallthru
      _
    // Predicated region
    $region22: #{tpu_custom_call.1} parent=1 // pred_check
      _
    $region23: #{tpu_custom_call.1} parent=1 // pred_check_branch
      %131 = sbr.rel (0) target = $region25
    $region24: #{tpu_custom_call.1} parent=1 // pred_region
      %132 = dma.done [#allocation4], 256
    $region25: #{tpu_custom_call.1} parent=1 // pred_fallthru
      _
    %133 = vsyncpa [#allocation3], 1
    %134 = vsyncpa [#allocation6], 1
    %135 = vsyncpa [#allocation4], 1

</llo_original>
